<compile_context>
chip_gen: v5e
topology: v5e:2x2
jax: 0.10.0
libtpu: 0.0.40
codegen_flags: <defaults>
</compile_context>

<pallas_src>
import numpy as np
import jax
import jax.numpy as jnp
from jax.experimental import pallas as pl
from jax.experimental.pallas import tpu as pltpu


# ------------------------------ Pallas kernel -------------------------------

def _convnet_fused_kernel(x_ref, m1_ref, m2_ref, m3_ref, wfc_ref, bias_ref, o_ref):
    # x:   (BN, 784) bf16   flattened 28x28 input
    # m1:  (784, 256) bf16  conv1 (pad=2) as dense matrix -> 16x16 map, row-major
    # m2:  (256, 64) bf16   conv2          as dense matrix -> 8x8  map, row-major
    # m3:  (64, 64) bf16    conv3 (1->4ch) as dense matrix -> NCHW-flatten order
    # wfc: (64, 128) bf16   fc1.weight.T zero-padded to 128 lanes
    # bias slab (3,128) f32: [0,0]=b1, [0,1]=b2, [1,:64]=b3 (per-channel repeat),
    #                        [2,:10]=fc bias, [2,10:]=-1e30 (pad lanes -> prob 0)
    b1 = bias_ref[0:1, 0:1]
    b2 = bias_ref[0:1, 1:2]
    b3 = bias_ref[1:2, 0:64]
    bf = bias_ref[2:3, :]

    h = x_ref[...]                                                  # bf16
    h = jnp.maximum(
        jnp.dot(h, m1_ref[...], preferred_element_type=jnp.float32) + b1, 0.0)
    h = jnp.maximum(
        jnp.dot(h.astype(jnp.bfloat16), m2_ref[...],
                preferred_element_type=jnp.float32) + b2, 0.0)
    h = jnp.maximum(
        jnp.dot(h.astype(jnp.bfloat16), m3_ref[...],
                preferred_element_type=jnp.float32) + b3, 0.0)
    logits = jnp.dot(h.astype(jnp.bfloat16), wfc_ref[...],
                     preferred_element_type=jnp.float32) + bf       # (BN, 128)

    # Numerically-stable softmax over the 128-lane slab; pad lanes hold -1e30
    # so their exp underflows to exactly 0.  Exact divide (cheap, one row).
    m = jnp.max(logits, axis=-1, keepdims=True)
    e = jnp.exp(logits - m)
    s = jnp.sum(e, axis=-1, keepdims=True)
    o_ref[...] = (e / s).astype(o_ref.dtype)


def _pick_block_n(n):
    """Batch tile: fill the MXU (up to 256 rows) but keep >=2 grid steps when N
    permits so the 'parallel' axis shards across 2 TensorCores on v7x."""
    if n <= 16:
        return n                         # single tile, block == full array
    half = -(-n // 2)                    # ceil(N/2)
    half = -(-half // 8) * 8             # round up to a multiple of 8 sublanes
    return min(256, half)


def convnet_forward(x, kparams):
    """x: (N, 1, 28, 28) -> (N, 10) class probabilities (single pallas_call)."""
    m1, m2, m3, wfc, bias_slab = kparams
    N = x.shape[0]
    x2 = x.reshape(N, -1).astype(jnp.bfloat16)   # (N, 784) bf16 input stream
    f_in = x2.shape[1]

    block_n = _pick_block_n(N)
    grid = (pl.cdiv(N, block_n),)

    flops = 2 * N * (f_in * m1.shape[1] + m2.shape[0] * m2.shape[1]
                     + m3.shape[0] * m3.shape[1] + wfc.shape[0] * wfc.shape[1])
    bytes_accessed = (x2.size * 2
                      + (m1.size + m2.size + m3.size + wfc.size) * 2
                      + bias_slab.size * 4
                      + N * 128 * 4)

    probs = pl.pallas_call(
        _convnet_fused_kernel,
        out_shape=jax.ShapeDtypeStruct((N, 128), jnp.float32),
        grid=grid,
        in_specs=[
            pl.BlockSpec((block_n, f_in), lambda i: (i, 0)),
            pl.BlockSpec(m1.shape, lambda i: (0, 0)),        # weights resident
            pl.BlockSpec(m2.shape, lambda i: (0, 0)),
            pl.BlockSpec(m3.shape, lambda i: (0, 0)),
            pl.BlockSpec(wfc.shape, lambda i: (0, 0)),
            pl.BlockSpec(bias_slab.shape, lambda i: (0, 0)),
        ],
        out_specs=pl.BlockSpec((block_n, 128), lambda i: (i, 0)),  # lane-dense
        compiler_params=pltpu.CompilerParams(
            dimension_semantics=("parallel",)),               # batch across TCs
        cost_estimate=pl.CostEstimate(flops=flops,
                                      transcendentals=N * 128,
                                      bytes_accessed=bytes_accessed),
    )(x2, m1, m2, m3, wfc, bias_slab)

    return probs[:, :10]                 # drop softmax pad lanes (exact zeros)


# ------------------------ host-side parameter prep ---------------------------

def _conv2x2_s2_as_matrix(w, pad, h_in, w_in):
    """Exact lowering of Conv2d(C_in=1, C_out, kernel=2, stride=2, padding=pad)
    to a dense matrix acting on the row-major flattened single-channel input.
    Output columns are ordered (c_out, oh, ow) == PyTorch NCHW flatten order."""
    w = np.asarray(w, np.float32)               # (C_out, 1, 2, 2)
    c_out = w.shape[0]
    h_out = (h_in + 2 * pad - 2) // 2 + 1
    w_out = (w_in + 2 * pad - 2) // 2 + 1
    mat = np.zeros((h_in * w_in, c_out * h_out * w_out), np.float32)
    for c in range(c_out):
        for oh in range(h_out):
            for ow in range(w_out):
                col = (c * h_out + oh) * w_out + ow
                for ky in range(2):
                    for kx in range(2):
                        hh = 2 * oh + ky - pad
                        ww = 2 * ow + kx - pad
                        if 0 <= hh < h_in and 0 <= ww < w_in:
                            mat[hh * w_in + ww, col] = w[c, 0, ky, kx]
    return mat


def prepare_params(params):
    """One-time prep: expand each conv into its dense matrix (bf16), pad the
    transposed fc weight to 128 lanes (bf16), and pack all biases into a single
    (3, 128) f32 VMEM slab whose fc row carries -1e30 on the pad lanes."""
    w1, b1, w2, b2, w3, b3, wf, bfc = params
    m1 = _conv2x2_s2_as_matrix(w1, pad=2, h_in=28, w_in=28)     # (784, 256)
    m2 = _conv2x2_s2_as_matrix(w2, pad=0, h_in=16, w_in=16)     # (256, 64)
    m3 = _conv2x2_s2_as_matrix(w3, pad=0, h_in=8,  w_in=8)      # (64, 64)

    wfc = np.zeros((64, 128), np.float32)
    wfc[:, :10] = np.asarray(wf, np.float32).T                  # (64, 128)

    bias_slab = np.zeros((3, 128), np.float32)
    bias_slab[0, 0] = float(np.asarray(b1, np.float32)[0])
    bias_slab[0, 1] = float(np.asarray(b2, np.float32)[0])
    bias_slab[1, :64] = np.repeat(np.asarray(b3, np.float32), 16)
    bias_slab[2, :] = -1e30                      # finite pad -> softmax exact 0
    bias_slab[2, :10] = np.asarray(bfc, np.float32)

    bf16 = jnp.bfloat16
    return (jnp.asarray(m1, dtype=bf16), jnp.asarray(m2, dtype=bf16),
            jnp.asarray(m3, dtype=bf16), jnp.asarray(wfc, dtype=bf16),
            jnp.asarray(bias_slab))              # biases stay f32


# --------------------------- pure-JAX reference ------------------------------

def convnet_reference(x, params):
    """Pure-JAX f32 reference (XLA conv) to validate the fused Pallas kernel."""
    w1, b1, w2, b2, w3, b3, wf, bfc = params

    def conv(h, w, b, pad):
        y = jax.lax.conv_general_dilated(
            h, w, window_strides=(2, 2), padding=((pad, pad), (pad, pad)),
            dimension_numbers=("NCHW", "OIHW", "NCHW"))
        return jax.nn.relu(y + b.reshape(1, -1, 1, 1))

    h = conv(x, w1, b1, 2)
    h = conv(h, w2, b2, 0)
    h = conv(h, w3, b3, 0)
    flat = h.reshape(h.shape[0], -1)
    return jax.nn.softmax(flat @ wf.T + bfc, axis=-1)


# ----------------------------------- main ------------------------------------

if __name__ == "__main__":
    key = jax.random.PRNGKey(0)
    ks = jax.random.split(key, 9)

    # Input: N=2, C=1, H=W=28 (implied by fc1 expecting 64 = 4*4*4 features).
    x = jax.random.normal(ks[0], (2, 1, 28, 28), dtype=jnp.float32)

    # Deterministic synthetic parameters (shapes from the PyTorch __init__).
    params = (
        0.5 * jax.random.normal(ks[1], (1, 1, 2, 2), dtype=jnp.float32),   # conv1.weight
        0.1 * jax.random.normal(ks[2], (1,), dtype=jnp.float32),           # conv1.bias
        0.5 * jax.random.normal(ks[3], (1, 1, 2, 2), dtype=jnp.float32),   # conv2.weight
        0.1 * jax.random.normal(ks[4], (1,), dtype=jnp.float32),           # conv2.bias
        0.5 * jax.random.normal(ks[5], (4, 1, 2, 2), dtype=jnp.float32),   # conv3.weight
        0.1 * jax.random.normal(ks[6], (4,), dtype=jnp.float32),           # conv3.bias
        0.2 * jax.random.normal(ks[7], (10, 64), dtype=jnp.float32),       # fc1.weight
        0.1 * jax.random.normal(ks[8], (10,), dtype=jnp.float32),          # fc1.bias
    )

    kparams = prepare_params(params)       # one-time host-side weight prep

    out = jax.jit(convnet_forward)(x, kparams)
    out = jax.block_until_ready(out)

    assert out.shape == (2, 10), out.shape
    ref = convnet_reference(x, params)
    # bf16 MXU inputs (f32 accumulation) -> relaxed tolerance vs f32 reference.
    np.testing.assert_allclose(np.asarray(out), np.asarray(ref),
                               rtol=5e-2, atol=1e-2)
    # Rows still sum to 1 (exact divide; pad lanes are exact zeros).
    np.testing.assert_allclose(np.asarray(out).sum(-1), np.ones(2), atol=1e-5)

    print("KERNEL_OK")
</pallas_src>

<mosaic_0001>
module attributes {stable_mosaic.version = 11 : i64} {
  func.func @_convnet_fused_kernel(%arg0: i32, %arg1: memref<2x784xbf16, #tpu.memory_space<vmem>>, %arg2: memref<784x256xbf16, #tpu.memory_space<vmem>>, %arg3: memref<256x64xbf16, #tpu.memory_space<vmem>>, %arg4: memref<64x64xbf16, #tpu.memory_space<vmem>>, %arg5: memref<64x128xbf16, #tpu.memory_space<vmem>>, %arg6: memref<3x128xf32, #tpu.memory_space<vmem>>, %arg7: memref<2x128xf32, #tpu.memory_space<vmem>>) attributes {dimension_semantics = [#tpu.dimension_semantics<parallel>], iteration_bounds = array<i64: 1>, scalar_prefetch = 0 : i64, scratch_operands = 0 : i64, tpu.core_type = #tpu.core_type<tc>, window_params = [{transform_indices = @transform_0, window_bounds = array<i64: 2, 784>}, {pipeline_mode = #tpu.pipeline_mode<synchronous>, transform_indices = @transform_1, window_bounds = array<i64: 784, 256>}, {pipeline_mode = #tpu.pipeline_mode<synchronous>, transform_indices = @transform_2, window_bounds = array<i64: 256, 64>}, {pipeline_mode = #tpu.pipeline_mode<synchronous>, transform_indices = @transform_3, window_bounds = array<i64: 64, 64>}, {pipeline_mode = #tpu.pipeline_mode<synchronous>, transform_indices = @transform_4, window_bounds = array<i64: 64, 128>}, {pipeline_mode = #tpu.pipeline_mode<synchronous>, transform_indices = @transform_5, window_bounds = array<i64: 3, 128>}, {transform_indices = @transform_6, window_bounds = array<i64: 2, 128>}]} {
    %c0 = arith.constant 0 : index
    %c0_0 = arith.constant 0 : index
    %0 = vector.load %arg6[%c0, %c0_0] : memref<3x128xf32, #tpu.memory_space<vmem>>, vector<1x1xf32>
    %c0_1 = arith.constant 0 : index
    %c1 = arith.constant 1 : index
    %1 = vector.load %arg6[%c0_1, %c1] : memref<3x128xf32, #tpu.memory_space<vmem>>, vector<1x1xf32>
    %c1_2 = arith.constant 1 : index
    %c0_3 = arith.constant 0 : index
    %2 = vector.load %arg6[%c1_2, %c0_3] : memref<3x128xf32, #tpu.memory_space<vmem>>, vector<1x64xf32>
    %c2 = arith.constant 2 : index
    %c0_4 = arith.constant 0 : index
    %3 = vector.load %arg6[%c2, %c0_4] : memref<3x128xf32, #tpu.memory_space<vmem>>, vector<1x128xf32>
    %c0_5 = arith.constant 0 : index
    %c0_6 = arith.constant 0 : index
    %4 = vector.load %arg1[%c0_5, %c0_6] : memref<2x784xbf16, #tpu.memory_space<vmem>>, vector<2x784xbf16>
    %c0_7 = arith.constant 0 : index
    %c0_8 = arith.constant 0 : index
    %5 = vector.load %arg2[%c0_7, %c0_8] : memref<784x256xbf16, #tpu.memory_space<vmem>>, vector<784x256xbf16>
    %cst = arith.constant dense<0.000000e+00> : vector<2x256xf32>
    %6 = tpu.matmul %4, %5, %cst {dimension_numbers = #tpu.dot_dimension_numbers<[1], [0], [0], [1], [0, 0, 1, 1], [], []>} : vector<2x784xbf16>, vector<784x256xbf16>, vector<2x256xf32> -> vector<2x256xf32>
    %7 = vector.broadcast %0 : vector<1x1xf32> to vector<2x256xf32>
    %8 = arith.addf %6, %7 : vector<2x256xf32>
    %cst_9 = arith.constant 0.000000e+00 : f32
    %9 = vector.broadcast %cst_9 : f32 to vector<2x256xf32>
    %10 = arith.maximumf %8, %9 : vector<2x256xf32>
    %11 = arith.truncf %10 : vector<2x256xf32> to vector<2x256xbf16>
    %c0_10 = arith.constant 0 : index
    %c0_11 = arith.constant 0 : index
    %12 = vector.load %arg3[%c0_10, %c0_11] : memref<256x64xbf16, #tpu.memory_space<vmem>>, vector<256x64xbf16>
    %cst_12 = arith.constant dense<0.000000e+00> : vector<2x64xf32>
    %13 = tpu.matmul %11, %12, %cst_12 {dimension_numbers = #tpu.dot_dimension_numbers<[1], [0], [0], [1], [0, 0, 1, 1], [], []>} : vector<2x256xbf16>, vector<256x64xbf16>, vector<2x64xf32> -> vector<2x64xf32>
    %14 = vector.broadcast %1 : vector<1x1xf32> to vector<2x64xf32>
    %15 = arith.addf %13, %14 : vector<2x64xf32>
    %cst_13 = arith.constant 0.000000e+00 : f32
    %16 = vector.broadcast %cst_13 : f32 to vector<2x64xf32>
    %17 = arith.maximumf %15, %16 : vector<2x64xf32>
    %18 = arith.truncf %17 : vector<2x64xf32> to vector<2x64xbf16>
    %c0_14 = arith.constant 0 : index
    %c0_15 = arith.constant 0 : index
    %19 = vector.load %arg4[%c0_14, %c0_15] : memref<64x64xbf16, #tpu.memory_space<vmem>>, vector<64x64xbf16>
    %cst_16 = arith.constant dense<0.000000e+00> : vector<2x64xf32>
    %20 = tpu.matmul %18, %19, %cst_16 {dimension_numbers = #tpu.dot_dimension_numbers<[1], [0], [0], [1], [0, 0, 1, 1], [], []>} : vector<2x64xbf16>, vector<64x64xbf16>, vector<2x64xf32> -> vector<2x64xf32>
    %21 = vector.broadcast %2 : vector<1x64xf32> to vector<2x64xf32>
    %22 = arith.addf %20, %21 : vector<2x64xf32>
    %cst_17 = arith.constant 0.000000e+00 : f32
    %23 = vector.broadcast %cst_17 : f32 to vector<2x64xf32>
    %24 = arith.maximumf %22, %23 : vector<2x64xf32>
    %25 = arith.truncf %24 : vector<2x64xf32> to vector<2x64xbf16>
    %c0_18 = arith.constant 0 : index
    %c0_19 = arith.constant 0 : index
    %26 = vector.load %arg5[%c0_18, %c0_19] : memref<64x128xbf16, #tpu.memory_space<vmem>>, vector<64x128xbf16>
    %cst_20 = arith.constant dense<0.000000e+00> : vector<2x128xf32>
    %27 = tpu.matmul %25, %26, %cst_20 {dimension_numbers = #tpu.dot_dimension_numbers<[1], [0], [0], [1], [0, 0, 1, 1], [], []>} : vector<2x64xbf16>, vector<64x128xbf16>, vector<2x128xf32> -> vector<2x128xf32>
    %28 = vector.broadcast %3 : vector<1x128xf32> to vector<2x128xf32>
    %29 = arith.addf %27, %28 : vector<2x128xf32>
    %cst_21 = arith.constant dense<0xFF800000> : vector<2xf32>
    %30 = vector.multi_reduction <maximumf>, %29, %cst_21 [1] : vector<2x128xf32> to vector<2xf32>
    %31 = vector.shape_cast %30 : vector<2xf32> to vector<2x1xf32>
    %32 = vector.broadcast %31 : vector<2x1xf32> to vector<2x128xf32>
    %33 = arith.subf %29, %32 : vector<2x128xf32>
    %34 = math.exp %33 : vector<2x128xf32>
    %cst_22 = arith.constant dense<0.000000e+00> : vector<2xf32>
    %35 = vector.multi_reduction <add>, %34, %cst_22 [1] : vector<2x128xf32> to vector<2xf32>
    %36 = vector.shape_cast %35 : vector<2xf32> to vector<2x1xf32>
    %37 = vector.broadcast %36 : vector<2x1xf32> to vector<2x128xf32>
    %38 = arith.divf %34, %37 : vector<2x128xf32>
    %c0_23 = arith.constant 0 : index
    %c0_24 = arith.constant 0 : index
    %39 = vector.load %arg7[%c0_23, %c0_24] : memref<2x128xf32, #tpu.memory_space<vmem>>, vector<2x128xf32>
    tpu.vector_store %arg7[%c0_23, %c0_24], %38 {strides = array<i32>} : memref<2x128xf32, #tpu.memory_space<vmem>>, vector<2x128xf32>,
    return
  }
  func.func @transform_0(%arg0: i32) -> (i32, i32) {
    %c0_i32 = arith.constant 0 : i32
    %c0_i32_0 = arith.constant 0 : i32
    return %arg0, %c0_i32 : i32, i32
  }
  func.func @transform_1(%arg0: i32) -> (i32, i32) {
    %c0_i32 = arith.constant 0 : i32
    %c0_i32_0 = arith.constant 0 : i32
    %c0_i32_1 = arith.constant 0 : i32
    return %c0_i32, %c0_i32_0 : i32, i32
  }
  func.func @transform_2(%arg0: i32) -> (i32, i32) {
    %c0_i32 = arith.constant 0 : i32
    %c0_i32_0 = arith.constant 0 : i32
    %c0_i32_1 = arith.constant 0 : i32
    return %c0_i32, %c0_i32_0 : i32, i32
  }
  func.func @transform_3(%arg0: i32) -> (i32, i32) {
    %c0_i32 = arith.constant 0 : i32
    %c0_i32_0 = arith.constant 0 : i32
    %c0_i32_1 = arith.constant 0 : i32
    return %c0_i32, %c0_i32_0 : i32, i32
  }
  func.func @transform_4(%arg0: i32) -> (i32, i32) {
    %c0_i32 = arith.constant 0 : i32
    %c0_i32_0 = arith.constant 0 : i32
    %c0_i32_1 = arith.constant 0 : i32
    return %c0_i32, %c0_i32_0 : i32, i32
  }
  func.func @transform_5(%arg0: i32) -> (i32, i32) {
    %c0_i32 = arith.constant 0 : i32
    %c0_i32_0 = arith.constant 0 : i32
    %c0_i32_1 = arith.constant 0 : i32
    return %c0_i32, %c0_i32_0 : i32, i32
  }
  func.func @transform_6(%arg0: i32) -> (i32, i32) {
    %c0_i32 = arith.constant 0 : i32
    %c0_i32_0 = arith.constant 0 : i32
    return %arg0, %c0_i32 : i32, i32
  }
}

</mosaic_0001>

<llo_original>
// kernel: convnet_forward.1
$region0: #{convnet_forward.1}
  #allocation0 [shape = 'u32[]', space=smem, size = 0x4, offset = 0x4, fixed_abs, tag = 'smem constant byte address 0x4 - core index']
  #allocation1 [shape = 'u32[72,128]{1,0:T(1,128)}', space=vmem, size = 0x9000, scoped, tag = 'internal scratch']
  %s0 = inlined_call_operand.vmem [shape: bf16[2,784], index: 0, kind: input, shape index: {}]
  %s1 = inlined_call_operand.hbm [shape: bf16[784,256], index: 1, kind: input, shape index: {}]
  %s2 = inlined_call_operand.vmem [shape: bf16[256,64], index: 2, kind: input, shape index: {}]
  %s3 = inlined_call_operand.vmem [shape: bf16[64,64], index: 3, kind: input, shape index: {}]
  %s4 = inlined_call_operand.vmem [shape: bf16[64,128], index: 4, kind: input, shape index: {}]
  %s5 = inlined_call_operand.vmem [shape: f32[3,128], index: 5, kind: input, shape index: {}]
  %s6 = inlined_call_operand.hbm [shape: f32[2,128], index: 6, kind: output, shape index: {}]
  %s7 = sld [smem:[#allocation0]]
  $region38: #{convnet_forward.1} parent=0
    _
  %s9 = ssub.s32 1, %s7
  %s10 = scalar_select 0, %s9, %s7
  $region1: #{convnet_forward.1} parent=0
    #allocation2 [shape = 'u8[401408]{0}', space=vmem, size = 0x62000, scoped, tag = 'input window, operand 1, single buffered']
    #allocation3 [shape = 's32[1]{0}', space=sflag, size = 0x4, scoped, tag = 'scoped memory for convnet_forward.1']
    #allocation4 [shape = 's32[1]{0}', space=sflag, size = 0x4, scoped, tag = 'scoped memory for convnet_forward.1']
    #allocation5 [shape = 'u8[1024]{0}', space=vmem, size = 0x400, scoped, tag = 'output window, operand 0, single buffered']
    %11 = vsyncpa [#allocation3], 0
    %12 = vsyncpa [#allocation4], 0
    // Predicated region
    $region2: #{convnet_forward.1} parent=1 // pred_check
      _
    $region3: #{convnet_forward.1} parent=1 // pred_check_branch
      %14 = sbr.rel (0) target = $region5
    $region4: #{convnet_forward.1} parent=1 // pred_region
      _
    $region5: #{convnet_forward.1} parent=1 // pred_fallthru
      _
    // Predicated region
    $region6: #{convnet_forward.1} parent=1 // pred_check
      _
    $region7: #{convnet_forward.1} parent=1 // pred_check_branch
      %16 = sbr.rel (0) target = $region9
    $region8: #{convnet_forward.1} parent=1 // pred_region
      %18 = vsyncadd [#allocation3], 0
      %s19 = sshll.u32 %s1, 4
      %s20 = int_to_ptr.hbm [resolvable:$true] %s19
      %s21 = sshll.u32 [#allocation2], 4
      %s22 = int_to_ptr.vmem [resolvable:$true] %s21
      %27 = dma.hbm_to_vmem [thread:$0]  %s20, 12544, %s22, [#allocation3], 128, 128, 8
    $region9: #{convnet_forward.1} parent=1 // pred_fallthru
      _
    // Predicated region
    $region10: #{convnet_forward.1} parent=1 // pred_check
      _
    $region11: #{convnet_forward.1} parent=1 // pred_check_branch
      %29 = sbr.rel (0) target = $region13
    $region12: #{convnet_forward.1} parent=1 // pred_region
      _
    $region13: #{convnet_forward.1} parent=1 // pred_fallthru
      _
    // Predicated region
    $region14: #{convnet_forward.1} parent=1 // pred_check
      _
    $region15: #{convnet_forward.1} parent=1 // pred_check_branch
      %31 = sbr.rel (0) target = $region17
    $region16: #{convnet_forward.1} parent=1 // pred_region
      _
    $region17: #{convnet_forward.1} parent=1 // pred_fallthru
      _
    // Predicated region
    $region18: #{convnet_forward.1} parent=1 // pred_check
      _
    $region19: #{convnet_forward.1} parent=1 // pred_check_branch
      %33 = sbr.rel (0) target = $region21
    $region20: #{convnet_forward.1} parent=1 // pred_region
      _
    $region21: #{convnet_forward.1} parent=1 // pred_fallthru
      _
    // Predicated region
    $region22: #{convnet_forward.1} parent=1 // pred_check
      _
    $region23: #{convnet_forward.1} parent=1 // pred_check_branch
      %35 = sbr.rel (0) target = $region25
    $region24: #{convnet_forward.1} parent=1 // pred_region
      _
    $region25: #{convnet_forward.1} parent=1 // pred_fallthru
      _
    // Predicated region
    $region26: #{convnet_forward.1} parent=1 // pred_check
      _
    $region27: #{convnet_forward.1} parent=1 // pred_check_branch
      %37 = sbr.rel (0) target = $region29
    $region28: #{convnet_forward.1} parent=1 // pred_region
      %39 = dma.done [#allocation3], 12544
    $region29: #{convnet_forward.1} parent=1 // pred_fallthru
      _
    %v41 = vld [vmem:[%s5] sm:$0x1]
    %v42 = vld [vmem:[%s5 + $0x1] sm:$0x1]
    %v43 = vld [vmem:[%s5 + $0x2] sm:$0x1]
    %v44 = vld [vmem:[%s0] sm:$0x7f]
    %v45 = vld [vmem:[#allocation2] sm:$0xff]
    %v46 = vld [vmem:[#allocation2 + $0x8] sm:$0xff]
    %v47 = vld [vmem:[#allocation2 + $0x10] sm:$0xff]
    %v48 = vld [vmem:[#allocation2 + $0x18] sm:$0xff]
    %v49 = vld [vmem:[#allocation2 + $0x20] sm:$0xff]
    %v50 = vld [vmem:[#allocation2 + $0x28] sm:$0xff]
    %v51 = vld [vmem:[#allocation2 + $0x30] sm:$0xff]
    %v52 = vld [vmem:[#allocation2 + $0x38] sm:$0xff]
    %v53 = vld [vmem:[#allocation2 + $0x40] sm:$0xff]
    %v54 = vld [vmem:[#allocation2 + $0x48] sm:$0xff]
    %v55 = vld [vmem:[#allocation2 + $0x50] sm:$0xff]
    %v56 = vld [vmem:[#allocation2 + $0x58] sm:$0xff]
    %v57 = vld [vmem:[#allocation2 + $0x60] sm:$0xff]
    %v58 = vld [vmem:[#allocation2 + $0x68] sm:$0xff]
    %v59 = vld [vmem:[#allocation2 + $0x70] sm:$0xff]
    %v60 = vld [vmem:[#allocation2 + $0x78] sm:$0xff]
    %v61 = vld [vmem:[#allocation2 + $0x80] sm:$0xff]
    %v62 = vld [vmem:[#allocation2 + $0x88] sm:$0xff]
    %v63 = vld [vmem:[#allocation2 + $0x90] sm:$0xff]
    %v64 = vld [vmem:[#allocation2 + $0x98] sm:$0xff]
    %v65 = vld [vmem:[#allocation2 + $0xa0] sm:$0xff]
    %v66 = vld [vmem:[#allocation2 + $0xa8] sm:$0xff]
    %v67 = vld [vmem:[#allocation2 + $0xb0] sm:$0xff]
    %v68 = vld [vmem:[#allocation2 + $0xb8] sm:$0xff]
    %v69 = vld [vmem:[#allocation2 + $0xc0] sm:$0xff]
    %v70 = vld [vmem:[#allocation2 + $0xc8] sm:$0xff]
    %v71 = vld [vmem:[#allocation2 + $0xd0] sm:$0xff]
    %v72 = vld [vmem:[#allocation2 + $0xd8] sm:$0xff]
    %v73 = vld [vmem:[#allocation2 + $0xe0] sm:$0xff]
    %v74 = vld [vmem:[#allocation2 + $0xe8] sm:$0xff]
    %v75 = vld [vmem:[#allocation2 + $0xf0] sm:$0xff]
    %v76 = vld [vmem:[#allocation2 + $0xf8] sm:$0xff]
    %v77 = vld [vmem:[#allocation2 + $0x100] sm:$0xff]
    %v78 = vld [vmem:[#allocation2 + $0x108] sm:$0xff]
    %v79 = vld [vmem:[#allocation2 + $0x110] sm:$0xff]
    %v80 = vld [vmem:[#allocation2 + $0x118] sm:$0xff]
    %v81 = vld [vmem:[#allocation2 + $0x120] sm:$0xff]
    %v82 = vld [vmem:[#allocation2 + $0x128] sm:$0xff]
    %v83 = vld [vmem:[#allocation2 + $0x130] sm:$0xff]
    %v84 = vld [vmem:[#allocation2 + $0x138] sm:$0xff]
    %v85 = vld [vmem:[#allocation2 + $0x140] sm:$0xff]
    %v86 = vld [vmem:[#allocation2 + $0x148] sm:$0xff]
    %v87 = vld [vmem:[#allocation2 + $0x150] sm:$0xff]
    %v88 = vld [vmem:[#allocation2 + $0x158] sm:$0xff]
    %v89 = vld [vmem:[#allocation2 + $0x160] sm:$0xff]
    %v90 = vld [vmem:[#allocation2 + $0x168] sm:$0xff]
    %v91 = vld [vmem:[#allocation2 + $0x170] sm:$0xff]
    %v92 = vld [vmem:[#allocation2 + $0x178] sm:$0xff]
    %v93 = vld [vmem:[#allocation2 + $0x180] sm:$0xff]
    %v94 = vld [vmem:[#allocation2 + $0x188] sm:$0xff]
    %v95 = vld [vmem:[#allocation2 + $0x190] sm:$0xff]
    %v96 = vld [vmem:[#allocation2 + $0x198] sm:$0xff]
    %v97 = vld [vmem:[#allocation2 + $0x1a0] sm:$0xff]
    %v98 = vld [vmem:[#allocation2 + $0x1a8] sm:$0xff]
    %v99 = vld [vmem:[#allocation2 + $0x1b0] sm:$0xff]
    %v100 = vld [vmem:[#allocation2 + $0x1b8] sm:$0xff]
    %v101 = vld [vmem:[#allocation2 + $0x1c0] sm:$0xff]
    %v102 = vld [vmem:[#allocation2 + $0x1c8] sm:$0xff]
    %v103 = vld [vmem:[#allocation2 + $0x1d0] sm:$0xff]
    %v104 = vld [vmem:[#allocation2 + $0x1d8] sm:$0xff]
    %v105 = vld [vmem:[#allocation2 + $0x1e0] sm:$0xff]
    %v106 = vld [vmem:[#allocation2 + $0x1e8] sm:$0xff]
    %v107 = vld [vmem:[#allocation2 + $0x1f0] sm:$0xff]
    %v108 = vld [vmem:[#allocation2 + $0x1f8] sm:$0xff]
    %v109 = vld [vmem:[#allocation2 + $0x200] sm:$0xff]
    %v110 = vld [vmem:[#allocation2 + $0x208] sm:$0xff]
    %v111 = vld [vmem:[#allocation2 + $0x210] sm:$0xff]
    %v112 = vld [vmem:[#allocation2 + $0x218] sm:$0xff]
    %v113 = vld [vmem:[#allocation2 + $0x220] sm:$0xff]
    %v114 = vld [vmem:[#allocation2 + $0x228] sm:$0xff]
    %v115 = vld [vmem:[#allocation2 + $0x230] sm:$0xff]
    %v116 = vld [vmem:[#allocation2 + $0x238] sm:$0xff]
    %v117 = vld [vmem:[#allocation2 + $0x240] sm:$0xff]
    %v118 = vld [vmem:[#allocation2 + $0x248] sm:$0xff]
    %v119 = vld [vmem:[#allocation2 + $0x250] sm:$0xff]
    %v120 = vld [vmem:[#allocation2 + $0x258] sm:$0xff]
    %v121 = vld [vmem:[#allocation2 + $0x260] sm:$0xff]
    %v122 = vld [vmem:[#allocation2 + $0x268] sm:$0xff]
    %v123 = vld [vmem:[#allocation2 + $0x270] sm:$0xff]
    %v124 = vld [vmem:[#allocation2 + $0x278] sm:$0xff]
    %v125 = vld [vmem:[#allocation2 + $0x280] sm:$0xff]
    %v126 = vld [vmem:[#allocation2 + $0x288] sm:$0xff]
    %v127 = vld [vmem:[#allocation2 + $0x290] sm:$0xff]
    %v128 = vld [vmem:[#allocation2 + $0x298] sm:$0xff]
    %v129 = vld [vmem:[#allocation2 + $0x2a0] sm:$0xff]
    %v130 = vld [vmem:[#allocation2 + $0x2a8] sm:$0xff]
    %v131 = vld [vmem:[#allocation2 + $0x2b0] sm:$0xff]
    %v132 = vld [vmem:[#allocation2 + $0x2b8] sm:$0xff]
    %v133 = vld [vmem:[#allocation2 + $0x2c0] sm:$0xff]
    %v134 = vld [vmem:[#allocation2 + $0x2c8] sm:$0xff]
    %v135 = vld [vmem:[#allocation2 + $0x2d0] sm:$0xff]
    %v136 = vld [vmem:[#allocation2 + $0x2d8] sm:$0xff]
    %v137 = vld [vmem:[#allocation2 + $0x2e0] sm:$0xff]
    %v138 = vld [vmem:[#allocation2 + $0x2e8] sm:$0xff]
    %v139 = vld [vmem:[#allocation2 + $0x2f0] sm:$0xff]
    %v140 = vld [vmem:[#allocation2 + $0x2f8] sm:$0xff]
    %v141 = vld [vmem:[#allocation2 + $0x300] sm:$0xff]
    %v142 = vld [vmem:[#allocation2 + $0x308] sm:$0xff]
    %s144 = vtos %v41
    %v145 = vstv %s144
    %148 = vst [vmem:[#allocation1] ss:$9 sm:$0xff] %v44
    %v149 = vld [vmem:[#allocation1] sm:$0xff]
    %v150 = vld [vmem:[#allocation1 + $0x9] sm:$0xff]
    %v151 = vld [vmem:[#allocation1 + $0x12] sm:$0xff]
    %v152 = vld [vmem:[#allocation1 + $0x1b] sm:$0xff]
    %v153 = vld [vmem:[#allocation1 + $0x24] sm:$0xff]
    %v154 = vld [vmem:[#allocation1 + $0x2d] sm:$0xff]
    %v155 = vld [vmem:[#allocation1 + $0x36] sm:$0xff]
    %v260 = vunpack.c.l.b16 %v45
    %v261 = vunpack.c.h.b16 %v45
    %v262 = vunpack.c.l.b16 %v46
    %v263 = vunpack.c.h.b16 %v46
    %v264 = vunpack.c.l.b16 %v47
    %v265 = vunpack.c.h.b16 %v47
    %v266 = vunpack.c.l.b16 %v48
    %v267 = vunpack.c.h.b16 %v48
    %v268 = vunpack.c.l.b16 %v49
    %v269 = vunpack.c.h.b16 %v49
    %v270 = vunpack.c.l.b16 %v50
    %v271 = vunpack.c.h.b16 %v50
    %v272 = vunpack.c.l.b16 %v51
    %v273 = vunpack.c.h.b16 %v51
    %v274 = vunpack.c.l.b16 %v52
    %v275 = vunpack.c.h.b16 %v52
    %v276 = vunpack.c.l.b16 %v53
    %v277 = vunpack.c.h.b16 %v53
    %v278 = vunpack.c.l.b16 %v54
    %v279 = vunpack.c.h.b16 %v54
    %v280 = vunpack.c.l.b16 %v55
    %v281 = vunpack.c.h.b16 %v55
    %v282 = vunpack.c.l.b16 %v56
    %v283 = vunpack.c.h.b16 %v56
    %v284 = vunpack.c.l.b16 %v57
    %v285 = vunpack.c.h.b16 %v57
    %v286 = vunpack.c.l.b16 %v58
    %v287 = vunpack.c.h.b16 %v58
    %v288 = vunpack.c.l.b16 %v59
    %v289 = vunpack.c.h.b16 %v59
    %v290 = vunpack.c.l.b16 %v60
    %v291 = vunpack.c.h.b16 %v60
    %v292 = vunpack.c.l.b16 %v61
    %v293 = vunpack.c.h.b16 %v61
    %v294 = vunpack.c.l.b16 %v62
    %v295 = vunpack.c.h.b16 %v62
    %v296 = vunpack.c.l.b16 %v63
    %v297 = vunpack.c.h.b16 %v63
    %v298 = vunpack.c.l.b16 %v64
    %v299 = vunpack.c.h.b16 %v64
    %v300 = vunpack.c.l.b16 %v65
    %v301 = vunpack.c.h.b16 %v65
    %v302 = vunpack.c.l.b16 %v66
    %v303 = vunpack.c.h.b16 %v66
    %v304 = vunpack.c.l.b16 %v67
    %v305 = vunpack.c.h.b16 %v67
    %v306 = vunpack.c.l.b16 %v68
    %v307 = vunpack.c.h.b16 %v68
    %v308 = vunpack.c.l.b16 %v69
    %v309 = vunpack.c.h.b16 %v69
    %v310 = vunpack.c.l.b16 %v70
    %v311 = vunpack.c.h.b16 %v70
    %v312 = vunpack.c.l.b16 %v71
    %v313 = vunpack.c.h.b16 %v71
    %v314 = vunpack.c.l.b16 %v72
    %v315 = vunpack.c.h.b16 %v72
    %v316 = vunpack.c.l.b16 %v73
    %v317 = vunpack.c.h.b16 %v73
    %v318 = vunpack.c.l.b16 %v74
    %v319 = vunpack.c.h.b16 %v74
    %v320 = vunpack.c.l.b16 %v75
    %v321 = vunpack.c.h.b16 %v75
    %v322 = vunpack.c.l.b16 %v76
    %v323 = vunpack.c.h.b16 %v76
    %v324 = vunpack.c.l.b16 %v77
    %v325 = vunpack.c.h.b16 %v77
    %v326 = vunpack.c.l.b16 %v78
    %v327 = vunpack.c.h.b16 %v78
    %v328 = vunpack.c.l.b16 %v79
    %v329 = vunpack.c.h.b16 %v79
    %v330 = vunpack.c.l.b16 %v80
    %v331 = vunpack.c.h.b16 %v80
    %v332 = vunpack.c.l.b16 %v81
    %v333 = vunpack.c.h.b16 %v81
    %v334 = vunpack.c.l.b16 %v82
    %v335 = vunpack.c.h.b16 %v82
    %v336 = vunpack.c.l.b16 %v83
    %v337 = vunpack.c.h.b16 %v83
    %v338 = vunpack.c.l.b16 %v84
    %v339 = vunpack.c.h.b16 %v84
    %v340 = vunpack.c.l.b16 %v85
    %v341 = vunpack.c.h.b16 %v85
    %v342 = vunpack.c.l.b16 %v86
    %v343 = vunpack.c.h.b16 %v86
    %v344 = vunpack.c.l.b16 %v87
    %v345 = vunpack.c.h.b16 %v87
    %v346 = vunpack.c.l.b16 %v88
    %v347 = vunpack.c.h.b16 %v88
    %v348 = vunpack.c.l.b16 %v89
    %v349 = vunpack.c.h.b16 %v89
    %v350 = vunpack.c.l.b16 %v90
    %v351 = vunpack.c.h.b16 %v90
    %v352 = vunpack.c.l.b16 %v91
    %v353 = vunpack.c.h.b16 %v91
    %v354 = vunpack.c.l.b16 %v92
    %v355 = vunpack.c.h.b16 %v92
    %v356 = vunpack.c.l.b16 %v93
    %v357 = vunpack.c.h.b16 %v93
    %v358 = vunpack.c.l.b16 %v94
    %v359 = vunpack.c.h.b16 %v94
    %v360 = vunpack.c.l.b16 %v95
    %v361 = vunpack.c.h.b16 %v95
    %v362 = vunpack.c.l.b16 %v96
    %v363 = vunpack.c.h.b16 %v96
    %v364 = vunpack.c.l.b16 %v97
    %v365 = vunpack.c.h.b16 %v97
    %v366 = vunpack.c.l.b16 %v98
    %v367 = vunpack.c.h.b16 %v98
    %v368 = vunpack.c.l.b16 %v99
    %v369 = vunpack.c.h.b16 %v99
    %v370 = vunpack.c.l.b16 %v100
    %v371 = vunpack.c.h.b16 %v100
    %v372 = vunpack.c.l.b16 %v101
    %v373 = vunpack.c.h.b16 %v101
    %v374 = vunpack.c.l.b16 %v102
    %v375 = vunpack.c.h.b16 %v102
    %v376 = vunpack.c.l.b16 %v103
    %v377 = vunpack.c.h.b16 %v103
    %v378 = vunpack.c.l.b16 %v104
    %v379 = vunpack.c.h.b16 %v104
    %v380 = vunpack.c.l.b16 %v105
    %v381 = vunpack.c.h.b16 %v105
    %v382 = vunpack.c.l.b16 %v106
    %v383 = vunpack.c.h.b16 %v106
    %v384 = vunpack.c.l.b16 %v107
    %v385 = vunpack.c.h.b16 %v107
    %v386 = vunpack.c.l.b16 %v108
    %v387 = vunpack.c.h.b16 %v108
    %v388 = vunpack.c.l.b16 %v109
    %v389 = vunpack.c.h.b16 %v109
    %v390 = vunpack.c.l.b16 %v110
    %v391 = vunpack.c.h.b16 %v110
    %v392 = vunpack.c.l.b16 %v111
    %v393 = vunpack.c.h.b16 %v111
    %v394 = vunpack.c.l.b16 %v112
    %v395 = vunpack.c.h.b16 %v112
    %v396 = vunpack.c.l.b16 %v113
    %v397 = vunpack.c.h.b16 %v113
    %v398 = vunpack.c.l.b16 %v114
    %v399 = vunpack.c.h.b16 %v114
    %v400 = vunpack.c.l.b16 %v115
    %v401 = vunpack.c.h.b16 %v115
    %v402 = vunpack.c.l.b16 %v116
    %v403 = vunpack.c.h.b16 %v116
    %v404 = vunpack.c.l.b16 %v117
    %v405 = vunpack.c.h.b16 %v117
    %v406 = vunpack.c.l.b16 %v118
    %v407 = vunpack.c.h.b16 %v118
    %v408 = vunpack.c.l.b16 %v119
    %v409 = vunpack.c.h.b16 %v119
    %v410 = vunpack.c.l.b16 %v120
    %v411 = vunpack.c.h.b16 %v120
    %v412 = vunpack.c.l.b16 %v121
    %v413 = vunpack.c.h.b16 %v121
    %v414 = vunpack.c.l.b16 %v122
    %v415 = vunpack.c.h.b16 %v122
    %v416 = vunpack.c.l.b16 %v123
    %v417 = vunpack.c.h.b16 %v123
    %v418 = vunpack.c.l.b16 %v124
    %v419 = vunpack.c.h.b16 %v124
    %v420 = vunpack.c.l.b16 %v125
    %v421 = vunpack.c.h.b16 %v125
    %v422 = vunpack.c.l.b16 %v126
    %v423 = vunpack.c.h.b16 %v126
    %v424 = vunpack.c.l.b16 %v127
    %v425 = vunpack.c.h.b16 %v127
    %v426 = vunpack.c.l.b16 %v128
    %v427 = vunpack.c.h.b16 %v128
    %v428 = vunpack.c.l.b16 %v129
    %v429 = vunpack.c.h.b16 %v129
    %v430 = vunpack.c.l.b16 %v130
    %v431 = vunpack.c.h.b16 %v130
    %v432 = vunpack.c.l.b16 %v131
    %v433 = vunpack.c.h.b16 %v131
    %v434 = vunpack.c.l.b16 %v132
    %v435 = vunpack.c.h.b16 %v132
    %v436 = vunpack.c.l.b16 %v133
    %v437 = vunpack.c.h.b16 %v133
    %v438 = vunpack.c.l.b16 %v134
    %v439 = vunpack.c.h.b16 %v134
    %v440 = vunpack.c.l.b16 %v135
    %v441 = vunpack.c.h.b16 %v135
    %v442 = vunpack.c.l.b16 %v136
    %v443 = vunpack.c.h.b16 %v136
    %v444 = vunpack.c.l.b16 %v137
    %v445 = vunpack.c.h.b16 %v137
    %v446 = vunpack.c.l.b16 %v138
    %v447 = vunpack.c.h.b16 %v138
    %v448 = vunpack.c.l.b16 %v139
    %v449 = vunpack.c.h.b16 %v139
    %v450 = vunpack.c.l.b16 %v140
    %v451 = vunpack.c.h.b16 %v140
    %v452 = vunpack.c.l.b16 %v141
    %v453 = vunpack.c.h.b16 %v141
    %v454 = vunpack.c.l.b16 %v142
    %v455 = vunpack.c.h.b16 %v142
    %v456 = vpack.c.b16 %v262, %v260
    %v457 = vpack.c.b16 %v263, %v261
    %v458 = vpack.c.b16 %v266, %v264
    %v459 = vpack.c.b16 %v267, %v265
    %v460 = vpack.c.b16 %v270, %v268
    %v461 = vpack.c.b16 %v271, %v269
    %v462 = vpack.c.b16 %v274, %v272
    %v463 = vpack.c.b16 %v275, %v273
    %v464 = vpack.c.b16 %v278, %v276
    %v465 = vpack.c.b16 %v279, %v277
    %v466 = vpack.c.b16 %v282, %v280
    %v467 = vpack.c.b16 %v283, %v281
    %v468 = vpack.c.b16 %v286, %v284
    %v469 = vpack.c.b16 %v287, %v285
    %v470 = vpack.c.b16 %v290, %v288
    %v471 = vpack.c.b16 %v291, %v289
    %v472 = vpack.c.b16 %v294, %v292
    %v473 = vpack.c.b16 %v295, %v293
    %v474 = vpack.c.b16 %v298, %v296
    %v475 = vpack.c.b16 %v299, %v297
    %v476 = vpack.c.b16 %v302, %v300
    %v477 = vpack.c.b16 %v303, %v301
    %v478 = vpack.c.b16 %v306, %v304
    %v479 = vpack.c.b16 %v307, %v305
    %v480 = vpack.c.b16 %v310, %v308
    %v481 = vpack.c.b16 %v311, %v309
    %v482 = vpack.c.b16 %v314, %v312
    %v483 = vpack.c.b16 %v315, %v313
    %v484 = vpack.c.b16 %v318, %v316
    %v485 = vpack.c.b16 %v319, %v317
    %v486 = vpack.c.b16 %v322, %v320
    %v487 = vpack.c.b16 %v323, %v321
    %v488 = vpack.c.b16 %v326, %v324
    %v489 = vpack.c.b16 %v327, %v325
    %v490 = vpack.c.b16 %v330, %v328
    %v491 = vpack.c.b16 %v331, %v329
    %v492 = vpack.c.b16 %v334, %v332
    %v493 = vpack.c.b16 %v335, %v333
    %v494 = vpack.c.b16 %v338, %v336
    %v495 = vpack.c.b16 %v339, %v337
    %v496 = vpack.c.b16 %v342, %v340
    %v497 = vpack.c.b16 %v343, %v341
    %v498 = vpack.c.b16 %v346, %v344
    %v499 = vpack.c.b16 %v347, %v345
    %v500 = vpack.c.b16 %v350, %v348
    %v501 = vpack.c.b16 %v351, %v349
    %v502 = vpack.c.b16 %v354, %v352
    %v503 = vpack.c.b16 %v355, %v353
    %v504 = vpack.c.b16 %v358, %v356
    %v505 = vpack.c.b16 %v359, %v357
    %v506 = vpack.c.b16 %v362, %v360
    %v507 = vpack.c.b16 %v363, %v361
    %v508 = vpack.c.b16 %v366, %v364
    %v509 = vpack.c.b16 %v367, %v365
    %v510 = vpack.c.b16 %v370, %v368
    %v511 = vpack.c.b16 %v371, %v369
    %v512 = vpack.c.b16 %v374, %v372
    %v513 = vpack.c.b16 %v375, %v373
    %v514 = vpack.c.b16 %v378, %v376
    %v515 = vpack.c.b16 %v379, %v377
    %v516 = vpack.c.b16 %v382, %v380
    %v517 = vpack.c.b16 %v383, %v381
    %v518 = vpack.c.b16 %v386, %v384
    %v519 = vpack.c.b16 %v387, %v385
    %v520 = vpack.c.b16 %v390, %v388
    %v521 = vpack.c.b16 %v391, %v389
    %v522 = vpack.c.b16 %v394, %v392
    %v523 = vpack.c.b16 %v395, %v393
    %v524 = vpack.c.b16 %v398, %v396
    %v525 = vpack.c.b16 %v399, %v397
    %v526 = vpack.c.b16 %v402, %v400
    %v527 = vpack.c.b16 %v403, %v401
    %v528 = vpack.c.b16 %v406, %v404
    %v529 = vpack.c.b16 %v407, %v405
    %v530 = vpack.c.b16 %v410, %v408
    %v531 = vpack.c.b16 %v411, %v409
    %v532 = vpack.c.b16 %v414, %v412
    %v533 = vpack.c.b16 %v415, %v413
    %v534 = vpack.c.b16 %v418, %v416
    %v535 = vpack.c.b16 %v419, %v417
    %v536 = vpack.c.b16 %v422, %v420
    %v537 = vpack.c.b16 %v423, %v421
    %v538 = vpack.c.b16 %v426, %v424
    %v539 = vpack.c.b16 %v427, %v425
    %v540 = vpack.c.b16 %v430, %v428
    %v541 = vpack.c.b16 %v431, %v429
    %v542 = vpack.c.b16 %v434, %v432
    %v543 = vpack.c.b16 %v435, %v433
    %v544 = vpack.c.b16 %v438, %v436
    %v545 = vpack.c.b16 %v439, %v437
    %v546 = vpack.c.b16 %v442, %v440
    %v547 = vpack.c.b16 %v443, %v441
    %v548 = vpack.c.b16 %v446, %v444
    %v549 = vpack.c.b16 %v447, %v445
    %v550 = vpack.c.b16 %v450, %v448
    %v551 = vpack.c.b16 %v451, %v449
    %v552 = vpack.c.b16 %v454, %v452
    %v553 = vpack.c.b16 %v455, %v453
    %vm652 = vcmask 130048
    %v653 = vsel %vm652, %v155, 0
    %655 = vmatpush.bf16.msra.mxu0 %v470
    %656 = vmatpush.bf16.msra.mxu0 %v468
    %657 = vmatpush.bf16.msra.mxu0 %v466
    %658 = vmatpush.bf16.msra.mxu0 %v464
    %659 = vmatpush.bf16.msra.mxu0 %v462
    %660 = vmatpush.bf16.msra.mxu0 %v460
    %661 = vmatpush.bf16.msra.mxu0 %v458
    %662 = vmatpush.bf16.msra.mxu0 %v456
    %663 = vmatmul.bf16.gmra.mxu0 %v149
    %v664 = vpop.f32.mrf.mxu0
    %v665 = vadd.f32 %v145, %v664
    %v666 = vpop.f32.mrf.mxu0
    %667 = vdwg.mxu0
    %668 = vmatpush.bf16.msra.mxu0 %v486
    %669 = vmatpush.bf16.msra.mxu0 %v484
    %670 = vmatpush.bf16.msra.mxu0 %v482
    %671 = vmatpush.bf16.msra.mxu0 %v480
    %672 = vmatpush.bf16.msra.mxu0 %v478
    %673 = vmatpush.bf16.msra.mxu0 %v476
    %674 = vmatpush.bf16.msra.mxu0 %v474
    %675 = vmatpush.bf16.msra.mxu0 %v472
    %676 = vmatmul.bf16.gmra.mxu0 %v150
    %v677 = vpop.f32.mrf.mxu0
    %v678 = vadd.f32 %v665, %v677
    %v679 = vpop.f32.mrf.mxu0
    %680 = vdwg.mxu0
    %681 = vmatpush.bf16.msra.mxu0 %v502
    %682 = vmatpush.bf16.msra.mxu0 %v500
    %683 = vmatpush.bf16.msra.mxu0 %v498
    %684 = vmatpush.bf16.msra.mxu0 %v496
    %685 = vmatpush.bf16.msra.mxu0 %v494
    %686 = vmatpush.bf16.msra.mxu0 %v492
    %687 = vmatpush.bf16.msra.mxu0 %v490
    %688 = vmatpush.bf16.msra.mxu0 %v488
    %689 = vmatmul.bf16.gmra.mxu0 %v151
    %v690 = vpop.f32.mrf.mxu0
    %v691 = vadd.f32 %v678, %v690
    %v692 = vpop.f32.mrf.mxu0
    %693 = vdwg.mxu0
    %694 = vmatpush.bf16.msra.mxu0 %v518
    %695 = vmatpush.bf16.msra.mxu0 %v516
    %696 = vmatpush.bf16.msra.mxu0 %v514
    %697 = vmatpush.bf16.msra.mxu0 %v512
    %698 = vmatpush.bf16.msra.mxu0 %v510
    %699 = vmatpush.bf16.msra.mxu0 %v508
    %700 = vmatpush.bf16.msra.mxu0 %v506
    %701 = vmatpush.bf16.msra.mxu0 %v504
    %702 = vmatmul.bf16.gmra.mxu0 %v152
    %v703 = vpop.f32.mrf.mxu0
    %v704 = vadd.f32 %v691, %v703
    %v705 = vpop.f32.mrf.mxu0
    %706 = vdwg.mxu0
    %707 = vmatpush.bf16.msra.mxu0 %v534
    %708 = vmatpush.bf16.msra.mxu0 %v532
    %709 = vmatpush.bf16.msra.mxu0 %v530
    %710 = vmatpush.bf16.msra.mxu0 %v528
    %711 = vmatpush.bf16.msra.mxu0 %v526
    %712 = vmatpush.bf16.msra.mxu0 %v524
    %713 = vmatpush.bf16.msra.mxu0 %v522
    %714 = vmatpush.bf16.msra.mxu0 %v520
    %715 = vmatmul.bf16.gmra.mxu0 %v153
    %v716 = vpop.f32.mrf.mxu0
    %v717 = vadd.f32 %v704, %v716
    %v718 = vpop.f32.mrf.mxu0
    %719 = vdwg.mxu0
    %720 = vmatpush.bf16.msra.mxu0 %v550
    %721 = vmatpush.bf16.msra.mxu0 %v548
    %722 = vmatpush.bf16.msra.mxu0 %v546
    %723 = vmatpush.bf16.msra.mxu0 %v544
    %724 = vmatpush.bf16.msra.mxu0 %v542
    %725 = vmatpush.bf16.msra.mxu0 %v540
    %726 = vmatpush.bf16.msra.mxu0 %v538
    %727 = vmatpush.bf16.msra.mxu0 %v536
    %728 = vmatmul.bf16.gmra.mxu0 %v154
    %v729 = vpop.f32.mrf.mxu0
    %v730 = vadd.f32 %v717, %v729
    %v731 = vpop.f32.mrf.mxu0
    %732 = vdwg.mxu0
    %733 = vmatpush.bf16.msra.mxu0 0
    %734 = vmatpush.bf16.msra.mxu0 0
    %735 = vmatpush.bf16.msra.mxu0 0
    %736 = vmatpush.bf16.msra.mxu0 0
    %737 = vmatpush.bf16.msra.mxu0 0
    %738 = vmatpush.bf16.msra.mxu0 0
    %739 = vmatpush.bf16.msra.mxu0 0
    %740 = vmatpush.bf16.msra.mxu0 %v552
    %741 = vmatmul.bf16.gmra.mxu0 %v653
    %v742 = vpop.f32.mrf.mxu0
    %v743 = vadd.f32 %v730, %v742
    %v744 = vpop.f32.mrf.mxu0
    %745 = vdwg.mxu0
    %746 = vmatpush.bf16.msra.mxu0 %v471
    %747 = vmatpush.bf16.msra.mxu0 %v469
    %748 = vmatpush.bf16.msra.mxu0 %v467
    %749 = vmatpush.bf16.msra.mxu0 %v465
    %750 = vmatpush.bf16.msra.mxu0 %v463
    %751 = vmatpush.bf16.msra.mxu0 %v461
    %752 = vmatpush.bf16.msra.mxu0 %v459
    %753 = vmatpush.bf16.msra.mxu0 %v457
    %754 = vmatmul.bf16.gmra.mxu0 %v149
    %v755 = vpop.f32.mrf.mxu0
    %v756 = vadd.f32 %v145, %v755
    %v757 = vpop.f32.mrf.mxu0
    %758 = vdwg.mxu0
    %759 = vmatpush.bf16.msra.mxu0 %v487
    %760 = vmatpush.bf16.msra.mxu0 %v485
    %761 = vmatpush.bf16.msra.mxu0 %v483
    %762 = vmatpush.bf16.msra.mxu0 %v481
    %763 = vmatpush.bf16.msra.mxu0 %v479
    %764 = vmatpush.bf16.msra.mxu0 %v477
    %765 = vmatpush.bf16.msra.mxu0 %v475
    %766 = vmatpush.bf16.msra.mxu0 %v473
    %767 = vmatmul.bf16.gmra.mxu0 %v150
    %v768 = vpop.f32.mrf.mxu0
    %v769 = vadd.f32 %v756, %v768
    %v770 = vpop.f32.mrf.mxu0
    %771 = vdwg.mxu0
    %772 = vmatpush.bf16.msra.mxu0 %v503
    %773 = vmatpush.bf16.msra.mxu0 %v501
    %774 = vmatpush.bf16.msra.mxu0 %v499
    %775 = vmatpush.bf16.msra.mxu0 %v497
    %776 = vmatpush.bf16.msra.mxu0 %v495
    %777 = vmatpush.bf16.msra.mxu0 %v493
    %778 = vmatpush.bf16.msra.mxu0 %v491
    %779 = vmatpush.bf16.msra.mxu0 %v489
    %780 = vmatmul.bf16.gmra.mxu0 %v151
    %v781 = vpop.f32.mrf.mxu0
    %v782 = vadd.f32 %v769, %v781
    %v783 = vpop.f32.mrf.mxu0
    %784 = vdwg.mxu0
    %785 = vmatpush.bf16.msra.mxu0 %v519
    %786 = vmatpush.bf16.msra.mxu0 %v517
    %787 = vmatpush.bf16.msra.mxu0 %v515
    %788 = vmatpush.bf16.msra.mxu0 %v513
    %789 = vmatpush.bf16.msra.mxu0 %v511
    %790 = vmatpush.bf16.msra.mxu0 %v509
    %791 = vmatpush.bf16.msra.mxu0 %v507
    %792 = vmatpush.bf16.msra.mxu0 %v505
    %793 = vmatmul.bf16.gmra.mxu0 %v152
    %v794 = vpop.f32.mrf.mxu0
    %v795 = vadd.f32 %v782, %v794
    %v796 = vpop.f32.mrf.mxu0
    %797 = vdwg.mxu0
    %798 = vmatpush.bf16.msra.mxu0 %v535
    %799 = vmatpush.bf16.msra.mxu0 %v533
    %800 = vmatpush.bf16.msra.mxu0 %v531
    %801 = vmatpush.bf16.msra.mxu0 %v529
    %802 = vmatpush.bf16.msra.mxu0 %v527
    %803 = vmatpush.bf16.msra.mxu0 %v525
    %804 = vmatpush.bf16.msra.mxu0 %v523
    %805 = vmatpush.bf16.msra.mxu0 %v521
    %806 = vmatmul.bf16.gmra.mxu0 %v153
    %v807 = vpop.f32.mrf.mxu0
    %v808 = vadd.f32 %v795, %v807
    %v809 = vpop.f32.mrf.mxu0
    %810 = vdwg.mxu0
    %811 = vmatpush.bf16.msra.mxu0 %v551
    %812 = vmatpush.bf16.msra.mxu0 %v549
    %813 = vmatpush.bf16.msra.mxu0 %v547
    %814 = vmatpush.bf16.msra.mxu0 %v545
    %815 = vmatpush.bf16.msra.mxu0 %v543
    %816 = vmatpush.bf16.msra.mxu0 %v541
    %817 = vmatpush.bf16.msra.mxu0 %v539
    %818 = vmatpush.bf16.msra.mxu0 %v537
    %819 = vmatmul.bf16.gmra.mxu0 %v154
    %v820 = vpop.f32.mrf.mxu0
    %v821 = vadd.f32 %v808, %v820
    %v822 = vpop.f32.mrf.mxu0
    %823 = vdwg.mxu0
    %824 = vmatpush.bf16.msra.mxu0 0
    %825 = vmatpush.bf16.msra.mxu0 0
    %826 = vmatpush.bf16.msra.mxu0 0
    %827 = vmatpush.bf16.msra.mxu0 0
    %828 = vmatpush.bf16.msra.mxu0 0
    %829 = vmatpush.bf16.msra.mxu0 0
    %830 = vmatpush.bf16.msra.mxu0 0
    %831 = vmatpush.bf16.msra.mxu0 %v553
    %832 = vmatmul.bf16.gmra.mxu0 %v653
    %v833 = vpop.f32.mrf.mxu0
    %v834 = vadd.f32 %v821, %v833
    %v835 = vpop.f32.mrf.mxu0
    %836 = vdwg.mxu0
    %v837 = vmax.f32 %v743, 0.0
    %v838 = vmax.f32 %v834, 0.0
    %v839 = vpack.c.bf16 %v837, %v837
    %v840 = vpack.c.bf16 %v838, %v838
    %v841 = vld [vmem:[%s2] sm:$0xf]
    %v842 = vld [vmem:[%s2 + $0x4] sm:$0xf]
    %v843 = vld [vmem:[%s2 + $0x8] sm:$0xf]
    %v844 = vld [vmem:[%s2 + $0xc] sm:$0xf]
    %v845 = vld [vmem:[%s2 + $0x10] sm:$0xf]
    %v846 = vld [vmem:[%s2 + $0x14] sm:$0xf]
    %v847 = vld [vmem:[%s2 + $0x18] sm:$0xf]
    %v848 = vld [vmem:[%s2 + $0x1c] sm:$0xf]
    %v849 = vld [vmem:[%s2 + $0x20] sm:$0xf]
    %v850 = vld [vmem:[%s2 + $0x24] sm:$0xf]
    %v851 = vld [vmem:[%s2 + $0x28] sm:$0xf]
    %v852 = vld [vmem:[%s2 + $0x2c] sm:$0xf]
    %v853 = vld [vmem:[%s2 + $0x30] sm:$0xf]
    %v854 = vld [vmem:[%s2 + $0x34] sm:$0xf]
    %v855 = vld [vmem:[%s2 + $0x38] sm:$0xf]
    %v856 = vld [vmem:[%s2 + $0x3c] sm:$0xf]
    %v857 = vld [vmem:[%s2 + $0x40] sm:$0xf]
    %v858 = vld [vmem:[%s2 + $0x44] sm:$0xf]
    %v859 = vld [vmem:[%s2 + $0x48] sm:$0xf]
    %v860 = vld [vmem:[%s2 + $0x4c] sm:$0xf]
    %v861 = vld [vmem:[%s2 + $0x50] sm:$0xf]
    %v862 = vld [vmem:[%s2 + $0x54] sm:$0xf]
    %v863 = vld [vmem:[%s2 + $0x58] sm:$0xf]
    %v864 = vld [vmem:[%s2 + $0x5c] sm:$0xf]
    %v865 = vld [vmem:[%s2 + $0x60] sm:$0xf]
    %v866 = vld [vmem:[%s2 + $0x64] sm:$0xf]
    %v867 = vld [vmem:[%s2 + $0x68] sm:$0xf]
    %v868 = vld [vmem:[%s2 + $0x6c] sm:$0xf]
    %v869 = vld [vmem:[%s2 + $0x70] sm:$0xf]
    %v870 = vld [vmem:[%s2 + $0x74] sm:$0xf]
    %v871 = vld [vmem:[%s2 + $0x78] sm:$0xf]
    %v872 = vld [vmem:[%s2 + $0x7c] sm:$0xf]
    %873 = vrot.lane.b32.xlu0 %v41, 127
    %v874 = vpop.permute.xlu0 %873
    %s875 = vtos %v874
    %v876 = vstv %s875
    %v910 = vunpack.c.l.b16 %v841
    %v911 = vunpack.c.l.b16 %v842
    %v912 = vunpack.c.l.b16 %v843
    %v913 = vunpack.c.l.b16 %v844
    %v914 = vunpack.c.l.b16 %v845
    %v915 = vunpack.c.l.b16 %v846
    %v916 = vunpack.c.l.b16 %v847
    %v917 = vunpack.c.l.b16 %v848
    %v918 = vunpack.c.l.b16 %v849
    %v919 = vunpack.c.l.b16 %v850
    %v920 = vunpack.c.l.b16 %v851
    %v921 = vunpack.c.l.b16 %v852
    %v922 = vunpack.c.l.b16 %v853
    %v923 = vunpack.c.l.b16 %v854
    %v924 = vunpack.c.l.b16 %v855
    %v925 = vunpack.c.l.b16 %v856
    %v926 = vunpack.c.l.b16 %v857
    %v927 = vunpack.c.l.b16 %v858
    %v928 = vunpack.c.l.b16 %v859
    %v929 = vunpack.c.l.b16 %v860
    %v930 = vunpack.c.l.b16 %v861
    %v931 = vunpack.c.l.b16 %v862
    %v932 = vunpack.c.l.b16 %v863
    %v933 = vunpack.c.l.b16 %v864
    %v934 = vunpack.c.l.b16 %v865
    %v935 = vunpack.c.l.b16 %v866
    %v936 = vunpack.c.l.b16 %v867
    %v937 = vunpack.c.l.b16 %v868
    %v938 = vunpack.c.l.b16 %v869
    %v939 = vunpack.c.l.b16 %v870
    %v940 = vunpack.c.l.b16 %v871
    %v941 = vunpack.c.l.b16 %v872
    %v942 = vpack.c.b16 %v911, %v910
    %v943 = vpack.c.b16 %v913, %v912
    %v944 = vpack.c.b16 %v915, %v914
    %v945 = vpack.c.b16 %v917, %v916
    %v946 = vpack.c.b16 %v919, %v918
    %v947 = vpack.c.b16 %v921, %v920
    %v948 = vpack.c.b16 %v923, %v922
    %v949 = vpack.c.b16 %v925, %v924
    %v950 = vpack.c.b16 %v927, %v926
    %v951 = vpack.c.b16 %v929, %v928
    %v952 = vpack.c.b16 %v931, %v930
    %v953 = vpack.c.b16 %v933, %v932
    %v954 = vpack.c.b16 %v935, %v934
    %v955 = vpack.c.b16 %v937, %v936
    %v956 = vpack.c.b16 %v939, %v938
    %v957 = vpack.c.b16 %v941, %v940
    %974 = vmatpush.bf16.msra.mxu0 %v949
    %975 = vmatpush.bf16.msra.mxu0 %v948
    %976 = vmatpush.bf16.msra.mxu0 %v947
    %977 = vmatpush.bf16.msra.mxu0 %v946
    %978 = vmatpush.bf16.msra.mxu0 %v945
    %979 = vmatpush.bf16.msra.mxu0 %v944
    %980 = vmatpush.bf16.msra.mxu0 %v943
    %981 = vmatpush.bf16.msra.mxu0 %v942
    %982 = vmatmul.bf16.gmra.mxu0 %v839
    %v983 = vpop.f32.mrf.mxu0
    %v984 = vadd.f32 %v876, %v983
    %v985 = vpop.f32.mrf.mxu0
    %986 = vdwg.mxu0
    %987 = vmatpush.bf16.msra.mxu0 %v957
    %988 = vmatpush.bf16.msra.mxu0 %v956
    %989 = vmatpush.bf16.msra.mxu0 %v955
    %990 = vmatpush.bf16.msra.mxu0 %v954
    %991 = vmatpush.bf16.msra.mxu0 %v953
    %992 = vmatpush.bf16.msra.mxu0 %v952
    %993 = vmatpush.bf16.msra.mxu0 %v951
    %994 = vmatpush.bf16.msra.mxu0 %v950
    %995 = vmatmul.bf16.gmra.mxu0 %v840
    %v996 = vpop.f32.mrf.mxu0
    %v997 = vadd.f32 %v984, %v996
    %v998 = vpop.f32.mrf.mxu0
    %999 = vdwg.mxu0
    %v1000 = vmax.f32 %v997, 0.0
    %v1001 = vpack.c.bf16 %v1000, %v1000
    %v1002 = vld [vmem:[%s3] sm:$0xf]
    %v1003 = vld [vmem:[%s3 + $0x4] sm:$0xf]
    %v1004 = vld [vmem:[%s3 + $0x8] sm:$0xf]
    %v1005 = vld [vmem:[%s3 + $0xc] sm:$0xf]
    %v1006 = vld [vmem:[%s3 + $0x10] sm:$0xf]
    %v1007 = vld [vmem:[%s3 + $0x14] sm:$0xf]
    %v1008 = vld [vmem:[%s3 + $0x18] sm:$0xf]
    %v1009 = vld [vmem:[%s3 + $0x1c] sm:$0xf]
    %v1010 = vperm.slane %v42, 0
    %v1019 = vunpack.c.l.b16 %v1002
    %v1020 = vunpack.c.l.b16 %v1003
    %v1021 = vunpack.c.l.b16 %v1004
    %v1022 = vunpack.c.l.b16 %v1005
    %v1023 = vunpack.c.l.b16 %v1006
    %v1024 = vunpack.c.l.b16 %v1007
    %v1025 = vunpack.c.l.b16 %v1008
    %v1026 = vunpack.c.l.b16 %v1009
    %v1027 = vpack.c.b16 %v1020, %v1019
    %v1028 = vpack.c.b16 %v1022, %v1021
    %v1029 = vpack.c.b16 %v1024, %v1023
    %v1030 = vpack.c.b16 %v1026, %v1025
    %vm1035 = vcmask 523264
    %v1037 = vsel %vm1035, %v1001, 0
    %1039 = vmatpush.bf16.msra.mxu0 0
    %1040 = vmatpush.bf16.msra.mxu0 0
    %1041 = vmatpush.bf16.msra.mxu0 0
    %1042 = vmatpush.bf16.msra.mxu0 0
    %1043 = vmatpush.bf16.msra.mxu0 %v1030
    %1044 = vmatpush.bf16.msra.mxu0 %v1029
    %1045 = vmatpush.bf16.msra.mxu0 %v1028
    %1046 = vmatpush.bf16.msra.mxu0 %v1027
    %1047 = vmatmul.bf16.gmra.mxu0 %v1037
    %v1048 = vpop.f32.mrf.mxu0
    %v1049 = vadd.f32 %v1010, %v1048
    %v1050 = vpop.f32.mrf.mxu0
    %1051 = vdwg.mxu0
    %v1052 = vmax.f32 %v1049, 0.0
    %v1053 = vpack.c.bf16 %v1052, %v1052
    %v1054 = vld [vmem:[%s4] sm:$0xf]
    %v1055 = vld [vmem:[%s4 + $0x4] sm:$0xf]
    %v1056 = vld [vmem:[%s4 + $0x8] sm:$0xf]
    %v1057 = vld [vmem:[%s4 + $0xc] sm:$0xf]
    %v1058 = vld [vmem:[%s4 + $0x10] sm:$0xf]
    %v1059 = vld [vmem:[%s4 + $0x14] sm:$0xf]
    %v1060 = vld [vmem:[%s4 + $0x18] sm:$0xf]
    %v1061 = vld [vmem:[%s4 + $0x1c] sm:$0xf]
    %v1062 = vperm.slane %v43, 0
    %v1071 = vunpack.c.l.b16 %v1054
    %v1072 = vunpack.c.l.b16 %v1055
    %v1073 = vunpack.c.l.b16 %v1056
    %v1074 = vunpack.c.l.b16 %v1057
    %v1075 = vunpack.c.l.b16 %v1058
    %v1076 = vunpack.c.l.b16 %v1059
    %v1077 = vunpack.c.l.b16 %v1060
    %v1078 = vunpack.c.l.b16 %v1061
    %v1079 = vpack.c.b16 %v1072, %v1071
    %v1080 = vpack.c.b16 %v1074, %v1073
    %v1081 = vpack.c.b16 %v1076, %v1075
    %v1082 = vpack.c.b16 %v1078, %v1077
    %v1088 = vsel %vm1035, %v1053, 0
    %1090 = vmatpush.bf16.msra.mxu0 0
    %1091 = vmatpush.bf16.msra.mxu0 0
    %1092 = vmatpush.bf16.msra.mxu0 0
    %1093 = vmatpush.bf16.msra.mxu0 0
    %1094 = vmatpush.bf16.msra.mxu0 %v1082
    %1095 = vmatpush.bf16.msra.mxu0 %v1081
    %1096 = vmatpush.bf16.msra.mxu0 %v1080
    %1097 = vmatpush.bf16.msra.mxu0 %v1079
    %1098 = vmatmul.bf16.gmra.mxu0 %v1088
    %v1099 = vpop.f32.mrf.mxu0
    %v1100 = vadd.f32 %v1062, %v1099
    %v1101 = vpop.f32.mrf.mxu0
    %1102 = vdwg.mxu0
    %vm1103 = vcmask 1041408
    %v1104 = vsel %vm1103, %v1100, -inf
    %1105 = vmax.xlane.f32.xlu0 %v1104
    %v1106 = vpop.xlane.xlu0 %1105
    %v1107 = vsub.f32 %v1100, %v1106
    %v1108 = vmul.f32 %v1107, 1.442695
    %v1109 = vpow.pop %v1108
    %v1110 = vsel %vm1103, %v1109, 0.0
    %1111 = vadd.xlane.f32.xlu0 %v1110
    %v1112 = vpop.xlane.xlu0 %1111
    %v1113 = vrcp.pop %v1112
    %v1114 = vmul.f32 %v1112, %v1113
    %v1115 = vsub.f32 1.0, %v1114
    %v1116 = vmul.f32 %v1113, %v1115
    %v1117 = vadd.f32 %v1113, %v1116
    %vm1118 = vweird.f32 %v1112
    %vm1119 = vweird.f32 %v1113
    %vm1120 = vmor %vm1118, %vm1119
    %v1121 = vsel %vm1120, %v1113, %v1117
    %v1122 = vand.u32 2147483647, %v1112
    %vm1123 = vcmp.eq.f32.partialorder %v1122, 8.507059e+37
    %v1124 = vand.u32 %v1112, 2147483648
    %v1125 = vor.u32 1.1754944e-38, %v1124
    %v1126 = vsel %vm1123, %v1125, %v1121
    %v1127 = vmul.f32 %v1109, %v1126
    %1128 = vst [vmem:[#allocation5] sm:$0x3] %v1127
    // Predicated region
    $region30: #{convnet_forward.1} parent=1 // pred_check
      _
    $region31: #{convnet_forward.1} parent=1 // pred_check_branch
      %1130 = sbr.rel (0) target = $region33
    $region32: #{convnet_forward.1} parent=1 // pred_region
      %1132 = vsyncadd [#allocation4], 0
      %s1134 = sshll.u32 [#allocation5], 4
      %s1135 = int_to_ptr.vmem [resolvable:$true] %s1134
      %s1136 = sshll.u32 %s6, 4
      %s1137 = int_to_ptr.hbm [resolvable:$true] %s1136
      %1139 = dma.vmem_to_hbm [thread:$0]  %s1135, 32, %s1137, [#allocation4]
    $region33: #{convnet_forward.1} parent=1 // pred_fallthru
      _
    // Predicated region
    $region34: #{convnet_forward.1} parent=1 // pred_check
      _
    $region35: #{convnet_forward.1} parent=1 // pred_check_branch
      %1141 = sbr.rel (0) target = $region37
    $region36: #{convnet_forward.1} parent=1 // pred_region
      %1143 = dma.done [#allocation4], 32
    $region37: #{convnet_forward.1} parent=1 // pred_fallthru
      _
    %1144 = vsyncpa [#allocation3], 1
    %1145 = vsyncpa [#allocation4], 1

</llo_original>
